<compile_context>
chip_gen: v7x
topology: tpu7x:2x2x1
jax: 0.10.0
libtpu: 0.0.40
codegen_flags: <defaults>
</compile_context>

<pallas_src>
import functools

import jax
import jax.numpy as jnp
from jax.experimental import pallas as pl
from jax.experimental.pallas import tpu as pltpu


# ----------------------------------------------------------------------------
# Small helpers
# ----------------------------------------------------------------------------
@functools.lru_cache(maxsize=1)
def _vmem_limit():
    """Generation-aware VMEM budget: ~half of physical capacity."""
    try:
        cap = int(pltpu.get_tpu_info().vmem_capacity_bytes)
    except Exception:
        cap = 64 * 1024 * 1024
    return max(16 * 1024 * 1024, min(cap // 2, 100 * 1024 * 1024))


def _pick_tm(m_rows, max_tm=2048):
    """Row tile for the 1x1 / tail kernels (HBM-bound -> bigger is better)."""
    for tm in (2048, 1024, 512, 256, 128, 64, 32, 16, 8):
        if tm <= max_tm and m_rows % tm == 0 and m_rows // tm >= 2:
            return tm
    for tm in (2048, 1024, 512, 256, 128, 64, 32, 16, 8):
        if tm < m_rows:
            return tm       # cdiv grid; Pallas clamps the ragged last tile
    return m_rows


def _pick_th(height, width, cmid):
    """Row tile (in image rows) for the fused bottleneck kernel."""
    max_rows = min(2048, max(8, (8 * 1024 * 1024) // (18 * max(cmid, 1))))
    for th in range(height // 2, 0, -1):
        if height % th == 0 and (th * width) % 8 == 0 and th * width <= max_rows:
            return th
    return height            # single tile fallback (block == full dim)


def _mish(x):
    """Mish(x) = x*tanh(softplus(x)) = x * z(z+2)/(z(z+2)+2), z = exp(x).

    Exact division; exp argument clamped at 20 so z^2 stays in f32 range
    (the ratio is already 1.0 there) and very negative x cleanly underflows.
    """
    z = jnp.exp(jnp.minimum(x, 20.0))
    num = z * (z + 2.0)
    return x * num / (num + 2.0)


# ----------------------------------------------------------------------------
# Pallas kernels
# ----------------------------------------------------------------------------
def _conv1x1_bn_act_kernel(x_ref, w_ref, s_ref, b_ref, m_ref, o_ref):
    """o = mish(x @ W * scale + bias) * mask    (Conv module, 1x1)."""
    y = jnp.dot(x_ref[...], w_ref[...], preferred_element_type=jnp.float32)
    o_ref[...] = (_mish(y * s_ref[...] + b_ref[...]) * m_ref[...]).astype(o_ref.dtype)


def _make_bottleneck_kernel(th, height, width, with_agg):
    """Fused Bottleneck (shortcut=True) over one (image, row-tile) grid cell.

        h = mish(bn1(x @ W1)) * mask                     (1x1 conv, bf16)
        c = im2col(h, 3x3, pad=1) @ W2   (ONE matmul, K = 9*C)
        o = mish(bn2(c)) * mask + x                      (residual)
        [agg_out = agg_in + coeff * x]                   (optional, aliased)

    hbuf stages h for th+2 image rows (halo recomputed / zeroed at borders)
    plus a W-row margin on each side so the 9 static slices never run out of
    bounds; the two out-of-image single elements those margins can leak are
    removed by the column-validity masks (jnp.where, so garbage never reaches
    the MXU).
    """
    W = width
    rows = th * W

    def body(x_ref, w1_ref, s1_ref, b1_ref, w2_ref, s2_ref, b2_ref, mask_ref,
             coeff_ref, agg_in_ref, o_ref, agg_out_ref, hbuf, col):
        cmid = hbuf.shape[1]
        bf = jnp.bfloat16
        j = pl.program_id(1)
        last = pl.num_programs(1) - 1
        row0 = pl.multiple_of(j * rows, rows)

        def conv1(xs):
            y = jnp.dot(xs, w1_ref[...], preferred_element_type=jnp.float32)
            return (_mish(y * s1_ref[...] + b1_ref[...]) * mask_ref[...]).astype(bf)

        # -- 1x1 conv for the tile's own rows + halo rows ----------------------
        x_main = x_ref[pl.ds(row0, rows), :]
        hbuf[2 * W:2 * W + rows, :] = conv1(x_main)

        zrow = jnp.zeros((W, cmid), bf)
        hbuf[W:2 * W, :] = zrow                               # top halo (pad)
        hbuf[(th + 2) * W:(th + 3) * W, :] = zrow             # bottom halo (pad)

        @pl.when(j > 0)
        def _():
            hbuf[W:2 * W, :] = conv1(x_ref[pl.ds(row0 - W, W), :])

        @pl.when(j < last)
        def _():
            hbuf[(th + 2) * W:(th + 3) * W, :] = conv1(
                x_ref[pl.ds(row0 + rows, W), :])

        # -- 3x3 conv: build the im2col slab once, one K = 9*C matmul ----------
        colpos = jax.lax.broadcasted_iota(jnp.int32, (rows, 1), 0) % W
        ok_left = colpos > 0            # reading column w-1 is valid
        ok_right = colpos < (W - 1)     # reading column w+1 is valid

        for kh in range(3):
            for kw in range(3):
                t = kh * 3 + kw
                start = W + kh * W + (kw - 1)        # static offset into hbuf
                slab = hbuf[start:start + rows, :]
                if kw == 0:
                    slab = jnp.where(ok_left, slab, jnp.zeros_like(slab))
                elif kw == 2:
                    slab = jnp.where(ok_right, slab, jnp.zeros_like(slab))
                col[:, t * cmid:(t + 1) * cmid] = slab

        acc = jnp.dot(col[...], w2_ref[...], preferred_element_type=jnp.float32)
        xf = x_main.astype(jnp.float32)
        y = _mish(acc * s2_ref[...] + b2_ref[...]) * mask_ref[...] + xf
        o_ref[...] = y.astype(o_ref.dtype)

        if with_agg:
            agg_out_ref[...] = agg_in_ref[...] + coeff_ref[0] * xf

    if with_agg:
        return body

    def no_agg(x_ref, w1_ref, s1_ref, b1_ref, w2_ref, s2_ref, b2_ref, mask_ref,
               o_ref, hbuf, col):
        body(x_ref, w1_ref, s1_ref, b1_ref, w2_ref, s2_ref, b2_ref, mask_ref,
             None, None, o_ref, None, hbuf, col)

    return no_agg


def _csp_tail_kernel(m_ref, x_ref, w3_ref, w2_ref, sa_ref, ba_ref, sb_ref,
                     bb_ref, w4_ref, s4_ref, b4_ref, o_ref, cat_buf):
    """cv4(mish(bn(cat(cv3(m)*mask, cv2(x)*mask)))) - gamma mask folded into
    the BN scale halves; cv4 is one K=2*c_ matmul fed from a VMEM concat
    buffer so the concat never touches HBM."""
    cmid = m_ref.shape[1]
    y1 = jnp.dot(m_ref[...], w3_ref[...], preferred_element_type=jnp.float32)
    y2 = jnp.dot(x_ref[...], w2_ref[...], preferred_element_type=jnp.float32)
    cat_buf[:, :cmid] = _mish(y1 * sa_ref[...] + ba_ref[...]).astype(jnp.bfloat16)
    cat_buf[:, cmid:] = _mish(y2 * sb_ref[...] + bb_ref[...]).astype(jnp.bfloat16)
    o = jnp.dot(cat_buf[...], w4_ref[...], preferred_element_type=jnp.float32)
    o_ref[...] = _mish(o * s4_ref[...] + b4_ref[...]).astype(o_ref.dtype)


# ----------------------------------------------------------------------------
# Kernel wrappers
# ----------------------------------------------------------------------------
def conv1x1_bn_act(x2d, w, s, b, mask):
    m_rows, k_in = x2d.shape
    n_out = w.shape[1]
    tm = _pick_tm(m_rows)
    cost = pl.CostEstimate(
        flops=2 * m_rows * k_in * n_out,
        transcendentals=m_rows * n_out,
        bytes_accessed=2 * m_rows * (k_in + n_out) + 2 * k_in * n_out)
    return pl.pallas_call(
        _conv1x1_bn_act_kernel,
        out_shape=jax.ShapeDtypeStruct((m_rows, n_out), jnp.bfloat16),
        grid=(pl.cdiv(m_rows, tm),),
        in_specs=[
            pl.BlockSpec((tm, k_in), lambda i: (i, 0)),
            pl.BlockSpec((k_in, n_out), lambda i: (0, 0)),
            pl.BlockSpec((1, n_out), lambda i: (0, 0)),
            pl.BlockSpec((1, n_out), lambda i: (0, 0)),
            pl.BlockSpec((1, n_out), lambda i: (0, 0)),
        ],
        out_specs=pl.BlockSpec((tm, n_out), lambda i: (i, 0)),
        compiler_params=pltpu.CompilerParams(
            dimension_semantics=("parallel",), vmem_limit_bytes=_vmem_limit()),
        cost_estimate=cost,
    )(x2d, w, s.reshape(1, n_out), b.reshape(1, n_out), mask.reshape(1, n_out))


def bottleneck_block(m3d, p, mask, height, width, agg=None, coeff=None):
    """One fused Bottleneck; grid = (batch, H // th) (both axes parallel)."""
    batch, hw, cmid = m3d.shape
    th = _pick_th(height, width, cmid)
    rows = th * width
    n_tiles = height // th
    with_agg = agg is not None
    kern = _make_bottleneck_kernel(th, height, width, with_agg)

    in_specs = [
        pl.BlockSpec((None, hw, cmid), lambda b, j: (b, 0, 0)),   # whole image
        pl.BlockSpec((cmid, cmid), lambda b, j: (0, 0)),          # w1
        pl.BlockSpec((1, cmid), lambda b, j: (0, 0)),             # s1
        pl.BlockSpec((1, cmid), lambda b, j: (0, 0)),             # b1
        pl.BlockSpec((9 * cmid, cmid), lambda b, j: (0, 0)),      # w2 (im2col)
        pl.BlockSpec((1, cmid), lambda b, j: (0, 0)),             # s2
        pl.BlockSpec((1, cmid), lambda b, j: (0, 0)),             # b2
        pl.BlockSpec((1, cmid), lambda b, j: (0, 0)),             # mask
    ]
    args = [m3d, p["w1"], p["s1"].reshape(1, cmid), p["b1"].reshape(1, cmid),
            p["w2"], p["s2"].reshape(1, cmid), p["b2"].reshape(1, cmid),
            mask.reshape(1, cmid)]

    o_sds = jax.ShapeDtypeStruct((batch, hw, cmid), jnp.bfloat16)
    o_spec = pl.BlockSpec((None, rows, cmid), lambda b, j: (b, j, 0))
    aliases = {}
    if with_agg:
        in_specs += [
            pl.BlockSpec(memory_space=pltpu.MemorySpace.SMEM),            # coeff
            pl.BlockSpec((None, rows, cmid), lambda b, j: (b, j, 0)),     # agg in
        ]
        args += [jnp.reshape(coeff, (1,)).astype(jnp.float32), agg]
        out_shape = (o_sds, jax.ShapeDtypeStruct((batch, hw, cmid), jnp.float32))
        out_specs = (o_spec,
                     pl.BlockSpec((None, rows, cmid), lambda b, j: (b, j, 0)))
        aliases = {9: 1}            # agg input aliases agg output
    else:
        out_shape = o_sds
        out_specs = o_spec

    cost = pl.CostEstimate(
        flops=2 * batch * hw * cmid * cmid * 10,
        transcendentals=2 * batch * hw * cmid,
        bytes_accessed=4 * batch * hw * cmid + 20 * cmid * cmid)

    outs = pl.pallas_call(
        kern,
        out_shape=out_shape,
        grid=(batch, n_tiles),
        in_specs=in_specs,
        out_specs=out_specs,
        scratch_shapes=[
            pltpu.VMEM(((th + 4) * width, cmid), jnp.bfloat16),   # h + halo + margins
            pltpu.VMEM((rows, 9 * cmid), jnp.bfloat16),           # im2col slab
        ],
        input_output_aliases=aliases,
        compiler_params=pltpu.CompilerParams(
            dimension_semantics=("parallel", "parallel"),
            vmem_limit_bytes=_vmem_limit()),
        cost_estimate=cost,
    )(*args)
    return outs


def csp_tail(m2d, x2d, prep, mask):
    m_rows, cmid = m2d.shape
    c1 = x2d.shape[1]
    c2 = prep["w4"].shape[1]
    tm = _pick_tm(m_rows)
    # fold the gamma mask into the BN scale halves (valid: mask -> BN is affine)
    sa = (prep["bn_s"][:cmid] * mask).reshape(1, cmid)
    sb = (prep["bn_s"][cmid:] * mask).reshape(1, cmid)
    ba = prep["bn_b"][:cmid].reshape(1, cmid)
    bb = prep["bn_b"][cmid:].reshape(1, cmid)
    cost = pl.CostEstimate(
        flops=2 * m_rows * (cmid * cmid + c1 * cmid + 2 * cmid * c2),
        transcendentals=m_rows * (2 * cmid + c2),
        bytes_accessed=2 * m_rows * (cmid + c1 + c2))
    return pl.pallas_call(
        _csp_tail_kernel,
        out_shape=jax.ShapeDtypeStruct((m_rows, c2), jnp.bfloat16),
        grid=(pl.cdiv(m_rows, tm),),
        in_specs=[
            pl.BlockSpec((tm, cmid), lambda i: (i, 0)),
            pl.BlockSpec((tm, c1), lambda i: (i, 0)),
            pl.BlockSpec((cmid, cmid), lambda i: (0, 0)),
            pl.BlockSpec((c1, cmid), lambda i: (0, 0)),
            pl.BlockSpec((1, cmid), lambda i: (0, 0)),
            pl.BlockSpec((1, cmid), lambda i: (0, 0)),
            pl.BlockSpec((1, cmid), lambda i: (0, 0)),
            pl.BlockSpec((1, cmid), lambda i: (0, 0)),
            pl.BlockSpec((2 * cmid, c2), lambda i: (0, 0)),
            pl.BlockSpec((1, c2), lambda i: (0, 0)),
            pl.BlockSpec((1, c2), lambda i: (0, 0)),
        ],
        out_specs=pl.BlockSpec((tm, c2), lambda i: (i, 0)),
        scratch_shapes=[pltpu.VMEM((tm, 2 * cmid), jnp.bfloat16)],
        compiler_params=pltpu.CompilerParams(
            dimension_semantics=("parallel",), vmem_limit_bytes=_vmem_limit()),
        cost_estimate=cost,
    )(m2d, x2d, prep["w3"], prep["w2c"], sa, ba, sb, bb, prep["w4"],
      prep["s4"].reshape(1, c2), prep["b4"].reshape(1, c2))


# ----------------------------------------------------------------------------
# Parameters (inference: BatchNorm folded into per-channel scale/bias)
# ----------------------------------------------------------------------------
def _fold_bn(gamma, beta, mean, var, eps=1e-5):
    scale = gamma / jnp.sqrt(var + eps)
    return scale, beta - mean * scale


def _init_conv_bn(key, cin, cout, ksize):
    kw, kg, kb, km, kv = jax.random.split(key, 5)
    w = jax.random.normal(kw, (cout, cin, ksize, ksize), jnp.float32) * 0.1
    gamma = jax.random.uniform(kg, (cout,), jnp.float32, 0.5, 1.5)
    beta = jax.random.normal(kb, (cout,), jnp.float32) * 0.1
    mean = jax.random.normal(km, (cout,), jnp.float32) * 0.1
    var = jax.random.uniform(kv, (cout,), jnp.float32, 0.5, 1.5)
    s, b = _fold_bn(gamma, beta, mean, var)
    if ksize == 1:
        w2 = w.reshape(cout, cin).T                                   # (cin, cout)
    else:
        w2 = w.transpose(2, 3, 1, 0).reshape(ksize * ksize, cin, cout)  # tap-major
    return {"w": w2, "s": s, "b": b}


def init_raw_params(key, c1, c2, gamma_space, bottleneck_space):
    e = max(gamma_space)
    c_ = int(c2 * e)
    n = max(bottleneck_space)
    channel_values = [int(g * c2) for g in gamma_space]
    keys = jax.random.split(key, 6 + 2 * max(n, 1))

    raw = {"c1": c1, "c2": c2, "c_": c_, "n": n,
           "bottleneck_space": list(bottleneck_space)}
    raw["cv1"] = _init_conv_bn(keys[0], c1, c_, 1)                  # Conv
    raw["cv4"] = _init_conv_bn(keys[1], 2 * c_, c2, 1)              # Conv
    # cv2 / cv3 are plain nn.Conv2d (no BN, no act, no bias)
    raw["cv2_w"] = (jax.random.normal(keys[2], (c_, c1, 1, 1), jnp.float32)
                    * 0.1).reshape(c_, c1).T
    raw["cv3_w"] = (jax.random.normal(keys[3], (c_, c_, 1, 1), jnp.float32)
                    * 0.1).reshape(c_, c_).T
    kg, kb, km, kv = jax.random.split(keys[4], 4)
    gamma = jax.random.uniform(kg, (2 * c_,), jnp.float32, 0.5, 1.5)
    beta = jax.random.normal(kb, (2 * c_,), jnp.float32) * 0.1
    mean = jax.random.normal(km, (2 * c_,), jnp.float32) * 0.1
    var = jax.random.uniform(kv, (2 * c_,), jnp.float32, 0.5, 1.5)
    raw["bn_s"], raw["bn_b"] = _fold_bn(gamma, beta, mean, var)

    raw["m"] = []
    for i in range(n):
        raw["m"].append({"cv1": _init_conv_bn(keys[5 + 2 * i], c_, c_, 1),
                         "cv2": _init_conv_bn(keys[6 + 2 * i], c_, c_, 3)})

    c_max = max(channel_values)
    masks = jnp.zeros((len(gamma_space), c_max), jnp.float32)
    for idx, nc in enumerate(channel_values):
        masks = masks.at[idx, :nc].set(1.0)
    raw["channel_masks"] = masks
    return raw


def prepare_params(raw):
    """Cast weights to bf16 (MXU), flatten the 3x3 weights to (9*c_, c_)."""
    bf = jnp.bfloat16
    c_ = raw["c_"]
    prep = {"c1": raw["c1"], "c2": raw["c2"], "c_": c_, "n": raw["n"],
            "bottleneck_space": list(raw["bottleneck_space"]),
            "channel_masks": raw["channel_masks"]}
    prep["cv1"] = {"w": raw["cv1"]["w"].astype(bf),
                   "s": raw["cv1"]["s"], "b": raw["cv1"]["b"]}
    prep["m"] = []
    for p in raw["m"]:
        prep["m"].append({
            "w1": p["cv1"]["w"].astype(bf), "s1": p["cv1"]["s"], "b1": p["cv1"]["b"],
            "w2": p["cv2"]["w"].reshape(9 * c_, c_).astype(bf),
            "s2": p["cv2"]["s"], "b2": p["cv2"]["b"]})
    prep["w3"] = raw["cv3_w"].astype(bf)
    prep["w2c"] = raw["cv2_w"].astype(bf)
    prep["w4"] = raw["cv4"]["w"].astype(bf)           # (2*c_, c2)
    prep["s4"] = raw["cv4"]["s"]
    prep["b4"] = raw["cv4"]["b"]
    prep["bn_s"] = raw["bn_s"]
    prep["bn_b"] = raw["bn_b"]
    return prep


# ----------------------------------------------------------------------------
# Forward pass (mirrors BottleneckCSP_Search.forward)
# ----------------------------------------------------------------------------
def bottleneck_csp_search_forward(prep, x_nchw, args=None):
    batch, c1, height, width = x_nchw.shape
    c_, c2, n = prep["c_"], prep["c2"], prep["n"]
    hw = height * width
    m_rows = batch * hw

    x2d = jnp.transpose(x_nchw, (0, 2, 3, 1)).reshape(m_rows, c1).astype(jnp.bfloat16)

    if args is not None and args.get("gamma") is not None:
        g = jnp.asarray(args["gamma"], jnp.float32)
        mask = jnp.sum(prep["channel_masks"] * g[:, None], axis=0)
    else:
        mask = jnp.ones((c_,), jnp.float32)

    # cv1 (1x1 Conv + BN + Mish + channel mask)
    m2d = conv1x1_bn_act(x2d, prep["cv1"]["w"], prep["cv1"]["s"],
                         prep["cv1"]["b"], mask)              # (M, c_) bf16
    m3d = m2d.reshape(batch, hw, c_)

    if args is not None and args.get("n_bottlenecks") is not None:
        depth_vals = prep["bottleneck_space"]
        dd = jnp.asarray(args["n_bottlenecks"], jnp.float32)
        agg = jnp.zeros((batch, hw, c_), jnp.float32)
        di = 0
        for depth in range(n + 1):
            is_agg = di < len(depth_vals) and depth == depth_vals[di]
            if depth == depth_vals[-1]:
                if is_agg:
                    # final aggregation point: no bottleneck follows
                    agg = agg + m3d.astype(jnp.float32) * dd[di]
                break
            if is_agg:
                # aggregation fused into the bottleneck kernel (aliased output)
                m3d, agg = bottleneck_block(m3d, prep["m"][depth], mask,
                                            height, width, agg=agg, coeff=dd[di])
                di += 1
            else:
                m3d = bottleneck_block(m3d, prep["m"][depth], mask, height, width)
        m2d = agg.astype(jnp.bfloat16).reshape(m_rows, c_)
    else:
        for depth in range(n):
            m3d = bottleneck_block(m3d, prep["m"][depth], mask, height, width)
        m2d = m3d.reshape(m_rows, c_)

    out2d = csp_tail(m2d, x2d, prep, mask)                    # (M, c2) bf16
    out = out2d.reshape(batch, height, width, c2).astype(jnp.float32)
    return jnp.transpose(out, (0, 3, 1, 2))                   # back to NCHW


# ----------------------------------------------------------------------------
# Pure-JAX reference (same bf16 cast points) for the numerical self-check
# ----------------------------------------------------------------------------
def _mish_ref(x):
    return x * jnp.tanh(jnp.logaddexp(x, 0.0))


def _im2col_3x3(x_nhwc):
    n, h, w, c = x_nhwc.shape
    xp = jnp.pad(x_nhwc, ((0, 0), (1, 1), (1, 1), (0, 0)))
    cols = [xp[:, kh:kh + h, kw:kw + w, :] for kh in range(3) for kw in range(3)]
    return jnp.concatenate(cols, axis=-1).reshape(n * h * w, 9 * c)


def reference_forward(raw, x_nchw, args=None):
    bf = jnp.bfloat16
    batch, c1, height, width = x_nchw.shape
    c_, c2, n = raw["c_"], raw["c2"], raw["n"]
    m_rows = batch * height * width

    x2d = jnp.transpose(x_nchw, (0, 2, 3, 1)).reshape(m_rows, c1).astype(bf)

    if args is not None and args.get("gamma") is not None:
        g = jnp.asarray(args["gamma"], jnp.float32)
        mask = jnp.sum(raw["channel_masks"] * g[:, None], axis=0)
    else:
        mask = jnp.ones((c_,), jnp.float32)

    def conv_bn_act(x_bf, p, nmask):
        y = jnp.dot(x_bf, p["w"].astype(bf), preferred_element_type=jnp.float32)
        return _mish_ref(y * p["s"] + p["b"]) * nmask

    def bottleneck(m_bf, p):
        h = conv_bn_act(m_bf, p["cv1"], mask).astype(bf)
        cols = _im2col_3x3(h.reshape(batch, height, width, c_))
        w9 = p["cv2"]["w"].reshape(9 * c_, c_).astype(bf)
        y = jnp.dot(cols, w9, preferred_element_type=jnp.float32)
        y = _mish_ref(y * p["cv2"]["s"] + p["cv2"]["b"]) * mask
        return (y + m_bf.astype(jnp.float32)).astype(bf)

    m_out = conv_bn_act(x2d, raw["cv1"], mask).astype(bf)
    if args is not None and args.get("n_bottlenecks") is not None:
        depth_vals = raw["bottleneck_space"]
        dd = jnp.asarray(args["n_bottlenecks"], jnp.float32)
        agg = jnp.zeros((m_rows, c_), jnp.float32)
        di = 0
        for depth in range(n + 1):
            if di < len(depth_vals) and depth == depth_vals[di]:
                agg = agg + m_out.astype(jnp.float32) * dd[di]
                di += 1
            if depth == depth_vals[-1]:
                break
            m_out = bottleneck(m_out, raw["m"][depth])
        m_out = agg.astype(bf)
    else:
        for depth in range(n):
            m_out = bottleneck(m_out, raw["m"][depth])

    y1 = jnp.dot(m_out, raw["cv3_w"].astype(bf),
                 preferred_element_type=jnp.float32) * mask
    y2 = jnp.dot(x2d, raw["cv2_w"].astype(bf),
                 preferred_element_type=jnp.float32) * mask
    cat = jnp.concatenate([y1, y2], axis=-1)
    a = _mish_ref(cat * raw["bn_s"] + raw["bn_b"]).astype(bf)
    out = jnp.dot(a, raw["cv4"]["w"].astype(bf),
                  preferred_element_type=jnp.float32)
    out = _mish_ref(out * raw["cv4"]["s"] + raw["cv4"]["b"])
    out = out.astype(bf).astype(jnp.float32)          # mirror bf16 writeback
    out = out.reshape(batch, height, width, c2)
    return jnp.transpose(out, (0, 3, 1, 2))


# ----------------------------------------------------------------------------
# Demo
# ----------------------------------------------------------------------------
if __name__ == "__main__":
    key = jax.random.PRNGKey(0)
    k_param, k_x, k_g, k_d = jax.random.split(key, 4)

    c1, c2 = 4, 8
    gamma_space = [0.25, 0.5, 0.75, 1.0]
    bottleneck_space = [0, 1, 2]

    raw = init_raw_params(k_param, c1, c2, gamma_space, bottleneck_space)
    prep = prepare_params(raw)

    x = jax.random.normal(k_x, (2, c1, 16, 16), jnp.float32)     # NCHW
    gamma_dist = jax.nn.softmax(jax.random.normal(k_g, (len(gamma_space),)))
    depth_dist = jax.nn.softmax(jax.random.normal(k_d, (len(bottleneck_space),)))
    search_args = {"gamma": gamma_dist, "n_bottlenecks": depth_dist}

    out_search = bottleneck_csp_search_forward(prep, x, args=search_args)
    out_plain = bottleneck_csp_search_forward(prep, x, args=None)
    jax.block_until_ready(out_search)
    jax.block_until_ready(out_plain)
    assert out_search.shape == (2, c2, 16, 16)
    assert out_plain.shape == (2, c2, 16, 16)

    # Numerical self-check vs a pure-JAX reference with matching bf16 cast points
    ref_search = reference_forward(raw, x, args=search_args)
    ref_plain = reference_forward(raw, x, args=None)
    err_s = float(jnp.max(jnp.abs(out_search - ref_search)))
    err_p = float(jnp.max(jnp.abs(out_plain - ref_plain)))
    assert jnp.allclose(out_search, ref_search, rtol=5e-2, atol=5e-2), err_s
    assert jnp.allclose(out_plain, ref_plain, rtol=5e-2, atol=5e-2), err_p

    print("KERNEL_OK")
</pallas_src>

<mosaic_0001>
module attributes {stable_mosaic.version = 11 : i64} {
  func.func @_conv1x1_bn_act_kernel(%arg0: i32, %arg1: memref<256x4xbf16, #tpu.memory_space<vmem>>, %arg2: memref<4x8xbf16, #tpu.memory_space<vmem>>, %arg3: memref<1x8xf32, #tpu.memory_space<vmem>>, %arg4: memref<1x8xf32, #tpu.memory_space<vmem>>, %arg5: memref<1x8xf32, #tpu.memory_space<vmem>>, %arg6: memref<256x8xbf16, #tpu.memory_space<vmem>>) attributes {dimension_semantics = [#tpu.dimension_semantics<parallel>], iteration_bounds = array<i64: 2>, scalar_prefetch = 0 : i64, scratch_operands = 0 : i64, tpu.core_type = #tpu.core_type<tc>, window_params = [{transform_indices = @transform_0, window_bounds = array<i64: 256, 4>}, {pipeline_mode = #tpu.pipeline_mode<synchronous>, transform_indices = @transform_1, window_bounds = array<i64: 4, 8>}, {pipeline_mode = #tpu.pipeline_mode<synchronous>, transform_indices = @transform_2, window_bounds = array<i64: 1, 8>}, {pipeline_mode = #tpu.pipeline_mode<synchronous>, transform_indices = @transform_3, window_bounds = array<i64: 1, 8>}, {pipeline_mode = #tpu.pipeline_mode<synchronous>, transform_indices = @transform_4, window_bounds = array<i64: 1, 8>}, {transform_indices = @transform_5, window_bounds = array<i64: 256, 8>}]} {
    %c0 = arith.constant 0 : index
    %c0_0 = arith.constant 0 : index
    %0 = vector.load %arg1[%c0, %c0_0] : memref<256x4xbf16, #tpu.memory_space<vmem>>, vector<256x4xbf16>
    %c0_1 = arith.constant 0 : index
    %c0_2 = arith.constant 0 : index
    %1 = vector.load %arg2[%c0_1, %c0_2] : memref<4x8xbf16, #tpu.memory_space<vmem>>, vector<4x8xbf16>
    %cst = arith.constant dense<0.000000e+00> : vector<256x8xf32>
    %2 = tpu.matmul %0, %1, %cst {dimension_numbers = #tpu.dot_dimension_numbers<[1], [0], [0], [1], [0, 0, 1, 1], [], []>} : vector<256x4xbf16>, vector<4x8xbf16>, vector<256x8xf32> -> vector<256x8xf32>
    %c0_3 = arith.constant 0 : index
    %c0_4 = arith.constant 0 : index
    %3 = vector.load %arg3[%c0_3, %c0_4] : memref<1x8xf32, #tpu.memory_space<vmem>>, vector<1x8xf32>
    %4 = vector.broadcast %3 : vector<1x8xf32> to vector<256x8xf32>
    %5 = arith.mulf %2, %4 : vector<256x8xf32>
    %c0_5 = arith.constant 0 : index
    %c0_6 = arith.constant 0 : index
    %6 = vector.load %arg4[%c0_5, %c0_6] : memref<1x8xf32, #tpu.memory_space<vmem>>, vector<1x8xf32>
    %7 = vector.broadcast %6 : vector<1x8xf32> to vector<256x8xf32>
    %8 = arith.addf %5, %7 : vector<256x8xf32>
    %cst_7 = arith.constant 2.000000e+01 : f32
    %9 = vector.broadcast %cst_7 : f32 to vector<256x8xf32>
    %10 = arith.minimumf %8, %9 : vector<256x8xf32>
    %11 = math.exp %10 : vector<256x8xf32>
    %cst_8 = arith.constant 2.000000e+00 : f32
    %12 = vector.broadcast %cst_8 : f32 to vector<256x8xf32>
    %13 = arith.addf %11, %12 : vector<256x8xf32>
    %14 = arith.mulf %11, %13 : vector<256x8xf32>
    %15 = arith.mulf %8, %14 : vector<256x8xf32>
    %cst_9 = arith.constant 2.000000e+00 : f32
    %16 = vector.broadcast %cst_9 : f32 to vector<256x8xf32>
    %17 = arith.addf %14, %16 : vector<256x8xf32>
    %18 = arith.divf %15, %17 : vector<256x8xf32>
    %c0_10 = arith.constant 0 : index
    %c0_11 = arith.constant 0 : index
    %19 = vector.load %arg5[%c0_10, %c0_11] : memref<1x8xf32, #tpu.memory_space<vmem>>, vector<1x8xf32>
    %20 = vector.broadcast %19 : vector<1x8xf32> to vector<256x8xf32>
    %21 = arith.mulf %18, %20 : vector<256x8xf32>
    %22 = arith.truncf %21 : vector<256x8xf32> to vector<256x8xbf16>
    %c0_12 = arith.constant 0 : index
    %c0_13 = arith.constant 0 : index
    %23 = vector.load %arg6[%c0_12, %c0_13] : memref<256x8xbf16, #tpu.memory_space<vmem>>, vector<256x8xbf16>
    tpu.vector_store %arg6[%c0_12, %c0_13], %22 {strides = array<i32>} : memref<256x8xbf16, #tpu.memory_space<vmem>>, vector<256x8xbf16>,
    return
  }
  func.func @transform_0(%arg0: i32) -> (i32, i32) {
    %c0_i32 = arith.constant 0 : i32
    %c0_i32_0 = arith.constant 0 : i32
    return %arg0, %c0_i32 : i32, i32
  }
  func.func @transform_1(%arg0: i32) -> (i32, i32) {
    %c0_i32 = arith.constant 0 : i32
    %c0_i32_0 = arith.constant 0 : i32
    %c0_i32_1 = arith.constant 0 : i32
    return %c0_i32, %c0_i32_0 : i32, i32
  }
  func.func @transform_2(%arg0: i32) -> (i32, i32) {
    %c0_i32 = arith.constant 0 : i32
    %c0_i32_0 = arith.constant 0 : i32
    %c0_i32_1 = arith.constant 0 : i32
    return %c0_i32, %c0_i32_0 : i32, i32
  }
  func.func @transform_3(%arg0: i32) -> (i32, i32) {
    %c0_i32 = arith.constant 0 : i32
    %c0_i32_0 = arith.constant 0 : i32
    %c0_i32_1 = arith.constant 0 : i32
    return %c0_i32, %c0_i32_0 : i32, i32
  }
  func.func @transform_4(%arg0: i32) -> (i32, i32) {
    %c0_i32 = arith.constant 0 : i32
    %c0_i32_0 = arith.constant 0 : i32
    %c0_i32_1 = arith.constant 0 : i32
    return %c0_i32, %c0_i32_0 : i32, i32
  }
  func.func @transform_5(%arg0: i32) -> (i32, i32) {
    %c0_i32 = arith.constant 0 : i32
    %c0_i32_0 = arith.constant 0 : i32
    return %arg0, %c0_i32 : i32, i32
  }
}

</mosaic_0001>

<llo_original>
// kernel: tpu_custom_call.1
$region0: #{tpu_custom_call.1}
  #allocation0 [shape = 'u32[]', space=smem, size = 0x4, offset = 0x4, fixed_abs, tag = 'smem constant byte address 0x4 - core index']
  #allocation1 [shape = 'u32[144,128]{1,0:T(1,128)}', space=vmem, size = 0x12000, scoped, tag = 'internal scratch']
  %s0 = inlined_call_operand.vmem [shape: bf16[512,4], index: 0, kind: input, shape index: {}]
  %s1 = inlined_call_operand.vmem [shape: bf16[4,8], index: 1, kind: input, shape index: {}]
  %s2 = inlined_call_operand.vmem [shape: f32[1,8], index: 2, kind: input, shape index: {}]
  %s3 = inlined_call_operand.vmem [shape: f32[1,8], index: 3, kind: input, shape index: {}]
  %s4 = inlined_call_operand.vmem [shape: f32[1,8], index: 4, kind: input, shape index: {}]
  %s5 = inlined_call_operand.vmem [shape: bf16[512,8], index: 5, kind: output, shape index: {}]
  %s6 = sld [smem:[#allocation0]]
  $region53: #{tpu_custom_call.1} parent=0
    _
  %s8 = ssub.s32 1, %s6
  %s9 = scalar_select 0, %s8, %s6
  loop: start=0, step=1, limit=4
  $region2: #{tpu_custom_call.1} parent=0 // loop_pre_header
    _
  $region3: #{tpu_custom_call.1} parent=0 // loop_header
    %s11 = sphi 0, %s15
    %p12 = scmp.ge.s32.totalorder %s11, 4
    %s21 = sphi 0, %s23
    %s24 = sphi 0, %s21
    %s25 = sphi 0, %s24
    %s41 = sphi 0, %s25
    %s45 = sphi 0, %s45
    %s47 = sphi 0, %s45
    %s48 = sphi 0, %s47
    %s62 = sphi 0, %s48
    %s66 = sphi 0, %s66
    %s68 = sphi 0, %s66
    %s69 = sphi 0, %s68
    %s83 = sphi 0, %s69
    %s87 = sphi 0, %s87
    %s89 = sphi 0, %s87
    %s90 = sphi 0, %s89
    %s104 = sphi 0, %s90
    %s108 = sphi 0, %s108
    %s110 = sphi 0, %s108
    %s111 = sphi 0, %s110
    %s125 = sphi 0, %s111
    %s131 = sphi 0, %s133
    %s134 = sphi 0, %s131
    %s135 = sphi 0, %s134
    %s151 = sphi 0, %s135
  $region4: #{tpu_custom_call.1} parent=0 // loop_header_branch
    %14 = sbr.rel (%p12) target = $region8
  $region5: #{tpu_custom_call.1} parent=0 // loop_body
    %s16 = ssub.s32 %s11, 1
    %s17 = ssub.s32 %s11, 2
    %s18 = sadd.s32 %s11, 1
    %s19 = ssub.s32 %s11, %s18
    %p20 = scmp.eq.s32.totalorder %s19, 0
    %s22 = sadd.s32 %s21, 1
    %s23 = scalar_select %p20, %s21, %s22
    %p26 = pneg %p20
    %p27 = scmp.eq.s32.totalorder %s11, 1
    %p28 = por %p26, %p27
    %p29 = scmp.ne.s32.totalorder %s21, %s24
    %p30 = scmp.eq.s32.totalorder %s11, 0
    %p31 = por %p29, %p30
    %p32 = scmp.ne.s32.totalorder %s21, %s24
    %p33 = scmp.eq.s32.totalorder %s16, 1
    %p34 = por %p32, %p33
    %p35 = scmp.ne.s32.totalorder %s24, %s25
    %p36 = scmp.eq.s32.totalorder %s16, 0
    %p37 = por %p35, %p36
    %p38 = scmp.ne.s32.totalorder %s24, %s25
    %p39 = scmp.eq.s32.totalorder %s17, 1
    %p40 = por %p38, %p39
    %p42 = scmp.ne.s32.totalorder %s25, %s41
    %p43 = scmp.eq.s32.totalorder %s17, 0
    %p44 = por %p42, %p43
    %s46 = sadd.s32 %s45, 1
    %p49 = scmp.eq.s32.totalorder %s11, 1
    %p50 = scmp.ne.s32.totalorder %s45, %s47
    %p51 = scmp.eq.s32.totalorder %s11, 0
    %p52 = por %p50, %p51
    %p53 = scmp.ne.s32.totalorder %s45, %s47
    %p54 = scmp.eq.s32.totalorder %s16, 1
    %p55 = por %p53, %p54
    %p56 = scmp.ne.s32.totalorder %s47, %s48
    %p57 = scmp.eq.s32.totalorder %s16, 0
    %p58 = por %p56, %p57
    %p59 = scmp.ne.s32.totalorder %s47, %s48
    %p60 = scmp.eq.s32.totalorder %s17, 1
    %p61 = por %p59, %p60
    %p63 = scmp.ne.s32.totalorder %s48, %s62
    %p64 = scmp.eq.s32.totalorder %s17, 0
    %p65 = por %p63, %p64
    %s67 = sadd.s32 %s66, 1
    %p70 = scmp.eq.s32.totalorder %s11, 1
    %p71 = scmp.ne.s32.totalorder %s66, %s68
    %p72 = scmp.eq.s32.totalorder %s11, 0
    %p73 = por %p71, %p72
    %p74 = scmp.ne.s32.totalorder %s66, %s68
    %p75 = scmp.eq.s32.totalorder %s16, 1
    %p76 = por %p74, %p75
    %p77 = scmp.ne.s32.totalorder %s68, %s69
    %p78 = scmp.eq.s32.totalorder %s16, 0
    %p79 = por %p77, %p78
    %p80 = scmp.ne.s32.totalorder %s68, %s69
    %p81 = scmp.eq.s32.totalorder %s17, 1
    %p82 = por %p80, %p81
    %p84 = scmp.ne.s32.totalorder %s69, %s83
    %p85 = scmp.eq.s32.totalorder %s17, 0
    %p86 = por %p84, %p85
    %s88 = sadd.s32 %s87, 1
    %p91 = scmp.eq.s32.totalorder %s11, 1
    %p92 = scmp.ne.s32.totalorder %s87, %s89
    %p93 = scmp.eq.s32.totalorder %s11, 0
    %p94 = por %p92, %p93
    %p95 = scmp.ne.s32.totalorder %s87, %s89
    %p96 = scmp.eq.s32.totalorder %s16, 1
    %p97 = por %p95, %p96
    %p98 = scmp.ne.s32.totalorder %s89, %s90
    %p99 = scmp.eq.s32.totalorder %s16, 0
    %p100 = por %p98, %p99
    %p101 = scmp.ne.s32.totalorder %s89, %s90
    %p102 = scmp.eq.s32.totalorder %s17, 1
    %p103 = por %p101, %p102
    %p105 = scmp.ne.s32.totalorder %s90, %s104
    %p106 = scmp.eq.s32.totalorder %s17, 0
    %p107 = por %p105, %p106
    %s109 = sadd.s32 %s108, 1
    %p112 = scmp.eq.s32.totalorder %s11, 1
    %p113 = scmp.ne.s32.totalorder %s108, %s110
    %p114 = scmp.eq.s32.totalorder %s11, 0
    %p115 = por %p113, %p114
    %p116 = scmp.ne.s32.totalorder %s108, %s110
    %p117 = scmp.eq.s32.totalorder %s16, 1
    %p118 = por %p116, %p117
    %p119 = scmp.ne.s32.totalorder %s110, %s111
    %p120 = scmp.eq.s32.totalorder %s16, 0
    %p121 = por %p119, %p120
    %p122 = scmp.ne.s32.totalorder %s110, %s111
    %p123 = scmp.eq.s32.totalorder %s17, 1
    %p124 = por %p122, %p123
    %p126 = scmp.ne.s32.totalorder %s111, %s125
    %p127 = scmp.eq.s32.totalorder %s17, 0
    %p128 = por %p126, %p127
    %s129 = ssub.s32 %s11, %s18
    %p130 = scmp.eq.s32.totalorder %s129, 0
    %s132 = sadd.s32 %s131, 1
    %s133 = scalar_select %p130, %s131, %s132
    %p136 = pneg %p130
    %p137 = scmp.eq.s32.totalorder %s11, 1
    %p138 = por %p136, %p137
    %p139 = scmp.ne.s32.totalorder %s131, %s134
    %p140 = scmp.eq.s32.totalorder %s11, 0
    %p141 = por %p139, %p140
    %p142 = scmp.ne.s32.totalorder %s131, %s134
    %p143 = scmp.eq.s32.totalorder %s16, 1
    %p144 = por %p142, %p143
    %p145 = scmp.ne.s32.totalorder %s134, %s135
    %p146 = scmp.eq.s32.totalorder %s16, 0
    %p147 = por %p145, %p146
    %p148 = scmp.ne.s32.totalorder %s134, %s135
    %p149 = scmp.eq.s32.totalorder %s17, 1
    %p150 = por %p148, %p149
    %p152 = scmp.ne.s32.totalorder %s135, %s151
    %p153 = scmp.eq.s32.totalorder %s17, 0
    %p154 = por %p152, %p153
    %p155 = scmp.le.s32.totalorder 1, %s11
    %p156 = scmp.lt.s32.totalorder %s11, 3
    %p157 = pnand %p155, %p156
    %p158 = pneg %p157
    // Predicated region
    $region9: #{tpu_custom_call.1} parent=5 // pred_check
      _
    $region10: #{tpu_custom_call.1} parent=5 // pred_check_branch
      %160 = sbr.rel (%p157) target = $region12
    $region11: #{tpu_custom_call.1} parent=5 // pred_region
      %s161 = ssub.s32 %s11, 1
      // Predicated region
      $region13: #{tpu_custom_call.1} parent=11 // pred_check
        %p162 = pneg %p58
      $region14: #{tpu_custom_call.1} parent=11 // pred_check_branch
        %164 = sbr.rel (%p162) target = $region16
      $region15: #{tpu_custom_call.1} parent=11 // pred_region
        _
      $region16: #{tpu_custom_call.1} parent=11 // pred_fallthru
        _
      // Predicated region
      $region17: #{tpu_custom_call.1} parent=11 // pred_check
        %p165 = pneg %p79
      $region18: #{tpu_custom_call.1} parent=11 // pred_check_branch
        %167 = sbr.rel (%p165) target = $region20
      $region19: #{tpu_custom_call.1} parent=11 // pred_region
        _
      $region20: #{tpu_custom_call.1} parent=11 // pred_fallthru
        _
      // Predicated region
      $region21: #{tpu_custom_call.1} parent=11 // pred_check
        %p168 = pneg %p100
      $region22: #{tpu_custom_call.1} parent=11 // pred_check_branch
        %170 = sbr.rel (%p168) target = $region24
      $region23: #{tpu_custom_call.1} parent=11 // pred_region
        _
      $region24: #{tpu_custom_call.1} parent=11 // pred_fallthru
        _
      // Predicated region
      $region25: #{tpu_custom_call.1} parent=11 // pred_check
        %p171 = pneg %p121
      $region26: #{tpu_custom_call.1} parent=11 // pred_check_branch
        %173 = sbr.rel (%p171) target = $region28
      $region27: #{tpu_custom_call.1} parent=11 // pred_region
        _
      $region28: #{tpu_custom_call.1} parent=11 // pred_fallthru
        _
    $region12: #{tpu_custom_call.1} parent=5 // pred_fallthru
      _
    %p174 = scmp.lt.s32.totalorder %s11, 2
    // Predicated region
    $region29: #{tpu_custom_call.1} parent=5 // pred_check
      %p175 = pneg %p174
    $region30: #{tpu_custom_call.1} parent=5 // pred_check_branch
      %177 = sbr.rel (%p175) target = $region32
    $region31: #{tpu_custom_call.1} parent=5 // pred_region
      // Predicated region
      $region33: #{tpu_custom_call.1} parent=31 // pred_check
        %p178 = pneg %p31
      $region34: #{tpu_custom_call.1} parent=31 // pred_check_branch
        %180 = sbr.rel (%p178) target = $region36
      $region35: #{tpu_custom_call.1} parent=31 // pred_region
        %s181 = smul.u32 32, %s11
        %p182 = scmp.lt.s32.totalorder %s181, 63
        %s183 = scalar_select %p182, %s181, 63
        %s184 = smul.addr %s183, 4
        %s185 = scalar_lea.vmem %s0, %s184
        %s186 = smul.u32 32, %s11
      $region36: #{tpu_custom_call.1} parent=31 // pred_fallthru
        _
    $region32: #{tpu_custom_call.1} parent=5 // pred_fallthru
      _
    %p187 = scmp.le.s32.totalorder 1, %s11
    %p188 = scmp.lt.s32.totalorder %s11, 3
    %p189 = pnand %p187, %p188
    %p190 = pneg %p189
    // Predicated region
    $region37: #{tpu_custom_call.1} parent=5 // pred_check
      _
    $region38: #{tpu_custom_call.1} parent=5 // pred_check_branch
      %192 = sbr.rel (%p189) target = $region40
    $region39: #{tpu_custom_call.1} parent=5 // pred_region
      %s193 = ssub.s32 %s11, 1
      %s194 = smul.u32 32, %s16
      %p195 = scmp.lt.s32.totalorder %s194, 63
      %s196 = scalar_select %p195, %s194, 63
      %s197 = smul.addr %s196, 4
      %s198 = scalar_lea.vmem %s0, %s197
      %p199 = pneg %p37
      %p200 = pneg %p34
      %p201 = pneg %p58
      %p202 = pneg %p55
      %p203 = pneg %p79
      %p204 = pneg %p76
      %p205 = pneg %p100
      %p206 = pneg %p97
      %p207 = pneg %p121
      %p208 = pneg %p118
      %p209 = pneg %p147
      %p210 = pneg %p144
      %s211 = smul.u32 32, %s16
      %p212 = scmp.lt.s32.totalorder %s211, 63
      %s213 = scalar_select %p212, %s211, 63
      %s214 = smul.addr %s213, 4
      %s215 = scalar_lea.vmem %s5, %s214
      %s216 = smul.u32 32, %s16
      %p217 = scmp.lt.s32.totalorder %s216, 63
      %s218 = scalar_select %p217, %s216, 63
      %s219 = smul.addr %s218, 4
      %s220 = scalar_lea.vmem %s0, %s219
      %s221 = smul.u32 32, %s16
      %s222 = smul.u32 32, %s16
      %p223 = scmp.lt.s32.totalorder %s222, 63
      %s224 = scalar_select %p223, %s222, 63
      %s225 = smul.addr %s224, 4
      %s226 = scalar_lea.vmem %s5, %s225
      %s227 = smul.u32 32, %s16
      %v229 = vld [vmem:[%s220] sm:$0xf]
      %v230 = vld [vmem:[%s220 + $0x4] sm:$0xf]
      %v231 = vld [vmem:[%s220 + $0x8] sm:$0xf]
      %v232 = vld [vmem:[%s220 + $0xc] sm:$0xf]
      %v233 = vld [vmem:[%s220 + $0x10] sm:$0xf]
      %v234 = vld [vmem:[%s220 + $0x14] sm:$0xf]
      %v235 = vld [vmem:[%s220 + $0x18] sm:$0xf]
      %v236 = vld [vmem:[%s220 + $0x1c] sm:$0xf]
      %v237 = vld [vmem:[%s220 + $0x20] sm:$0xf]
      %v238 = vld [vmem:[%s220 + $0x24] sm:$0xf]
      %v239 = vld [vmem:[%s220 + $0x28] sm:$0xf]
      %v240 = vld [vmem:[%s220 + $0x2c] sm:$0xf]
      %v241 = vld [vmem:[%s220 + $0x30] sm:$0xf]
      %v242 = vld [vmem:[%s220 + $0x34] sm:$0xf]
      %v243 = vld [vmem:[%s220 + $0x38] sm:$0xf]
      %v244 = vld [vmem:[%s220 + $0x3c] sm:$0xf]
      %v245 = vld [vmem:[%s220 + $0x40] sm:$0xf]
      %v246 = vld [vmem:[%s220 + $0x44] sm:$0xf]
      %v247 = vld [vmem:[%s220 + $0x48] sm:$0xf]
      %v248 = vld [vmem:[%s220 + $0x4c] sm:$0xf]
      %v249 = vld [vmem:[%s220 + $0x50] sm:$0xf]
      %v250 = vld [vmem:[%s220 + $0x54] sm:$0xf]
      %v251 = vld [vmem:[%s220 + $0x58] sm:$0xf]
      %v252 = vld [vmem:[%s220 + $0x5c] sm:$0xf]
      %v253 = vld [vmem:[%s220 + $0x60] sm:$0xf]
      %v254 = vld [vmem:[%s220 + $0x64] sm:$0xf]
      %v255 = vld [vmem:[%s220 + $0x68] sm:$0xf]
      %v256 = vld [vmem:[%s220 + $0x6c] sm:$0xf]
      %v257 = vld [vmem:[%s220 + $0x70] sm:$0xf]
      %v258 = vld [vmem:[%s220 + $0x74] sm:$0xf]
      %v259 = vld [vmem:[%s220 + $0x78] sm:$0xf]
      %v260 = vld [vmem:[%s220 + $0x7c] sm:$0xf]
      %v261 = vld [vmem:[%s1] sm:$0x3]
      %v294 = vunpack.c.l.b16 %v229
      %v295 = vunpack.c.l.b16 %v230
      %v296 = vunpack.c.l.b16 %v231
      %v297 = vunpack.c.l.b16 %v232
      %v298 = vunpack.c.l.b16 %v233
      %v299 = vunpack.c.l.b16 %v234
      %v300 = vunpack.c.l.b16 %v235
      %v301 = vunpack.c.l.b16 %v236
      %v302 = vunpack.c.l.b16 %v237
      %v303 = vunpack.c.l.b16 %v238
      %v304 = vunpack.c.l.b16 %v239
      %v305 = vunpack.c.l.b16 %v240
      %v306 = vunpack.c.l.b16 %v241
      %v307 = vunpack.c.l.b16 %v242
      %v308 = vunpack.c.l.b16 %v243
      %v309 = vunpack.c.l.b16 %v244
      %v310 = vunpack.c.l.b16 %v245
      %v311 = vunpack.c.l.b16 %v246
      %v312 = vunpack.c.l.b16 %v247
      %v313 = vunpack.c.l.b16 %v248
      %v314 = vunpack.c.l.b16 %v249
      %v315 = vunpack.c.l.b16 %v250
      %v316 = vunpack.c.l.b16 %v251
      %v317 = vunpack.c.l.b16 %v252
      %v318 = vunpack.c.l.b16 %v253
      %v319 = vunpack.c.l.b16 %v254
      %v320 = vunpack.c.l.b16 %v255
      %v321 = vunpack.c.l.b16 %v256
      %v322 = vunpack.c.l.b16 %v257
      %v323 = vunpack.c.l.b16 %v258
      %v324 = vunpack.c.l.b16 %v259
      %v325 = vunpack.c.l.b16 %v260
      %v326 = vpack.c.b16 %v295, %v294
      %v327 = vpack.c.b16 %v297, %v296
      %v328 = vpack.c.b16 %v299, %v298
      %v329 = vpack.c.b16 %v301, %v300
      %v330 = vpack.c.b16 %v303, %v302
      %v331 = vpack.c.b16 %v305, %v304
      %v332 = vpack.c.b16 %v307, %v306
      %v333 = vpack.c.b16 %v309, %v308
      %v334 = vpack.c.b16 %v311, %v310
      %v335 = vpack.c.b16 %v313, %v312
      %v336 = vpack.c.b16 %v315, %v314
      %v337 = vpack.c.b16 %v317, %v316
      %v338 = vpack.c.b16 %v319, %v318
      %v339 = vpack.c.b16 %v321, %v320
      %v340 = vpack.c.b16 %v323, %v322
      %v341 = vpack.c.b16 %v325, %v324
      %vm342 = vcmask 31744
      %v344 = vsel %vm342, %v326, 0
      %v347 = vsel %vm342, %v327, 0
      %v350 = vsel %vm342, %v328, 0
      %v353 = vsel %vm342, %v329, 0
      %v356 = vsel %vm342, %v330, 0
      %v359 = vsel %vm342, %v331, 0
      %v362 = vsel %vm342, %v332, 0
      %v365 = vsel %vm342, %v333, 0
      %v368 = vsel %vm342, %v334, 0
      %v371 = vsel %vm342, %v335, 0
      %v374 = vsel %vm342, %v336, 0
      %v377 = vsel %vm342, %v337, 0
      %v380 = vsel %vm342, %v338, 0
      %v383 = vsel %vm342, %v339, 0
      %v386 = vsel %vm342, %v340, 0
      %v389 = vsel %vm342, %v341, 0
      %vm391 = vcmask 1041408
      %v393 = vsel %vm391, %v261, 0
      %395 = vmatprep.subr.bf16.mxu0 0
      %396 = vmatpush1.bf16.msra.mxu0 %v393
      %397 = vmatprep.subr.bf16.mxu0 0
      %398 = vmatpush1.bf16.msra.mxu0 0
      %399 = vmatprep.subr.bf16.mxu0 0
      %400 = vmatpush1.bf16.msra.mxu0 0
      %401 = vmatprep.subr.bf16.mxu0 0
      %402 = vmatpush1.bf16.msra.mxu0 0
      %403 = vmatprep.subr.bf16.mxu0 0
      %404 = vmatpush1.bf16.msra.mxu0 0
      %405 = vmatprep.subr.bf16.mxu0 0
      %406 = vmatpush1.bf16.msra.mxu0 0
      %407 = vmatprep.subr.bf16.mxu0 0
      %408 = vmatpush1.bf16.msra.mxu0 0
      %409 = vmatprep.subr.bf16.mxu0 0
      %410 = vmatpush1.bf16.msra.mxu0 0
      %411 = vmatprep.subr.bf16.mxu0 0
      %412 = vmatpush1.bf16.msra.mxu0 0
      %413 = vmatprep.subr.bf16.mxu0 0
      %414 = vmatpush1.bf16.msra.mxu0 0
      %415 = vmatprep.subr.bf16.mxu0 0
      %416 = vmatpush1.bf16.msra.mxu0 0
      %417 = vmatprep.subr.bf16.mxu0 0
      %418 = vmatpush1.bf16.msra.mxu0 0
      %419 = vmatprep.subr.bf16.mxu0 0
      %420 = vmatpush1.bf16.msra.mxu0 0
      %421 = vmatprep.subr.bf16.mxu0 0
      %422 = vmatpush1.bf16.msra.mxu0 0
      %423 = vmatprep.subr.bf16.mxu0 0
      %424 = vmatpush1.bf16.msra.mxu0 0
      %425 = vmatprep.subr.bf16.mxu0 0
      %426 = vmatpush1.bf16.msra.mxu0 0
      %427 = vmatprep.mubr.bf16.mxu0 0
      %428 = vmatmul.mubr.bf16.gmra.mrb[0].mxu0 %v344
      %v429 = vpop.f32.mrb[0].mxu0
      %v430 = vadd.f32 0.0, %v429
      %v431 = vpop.f32.mrb[0].mxu0
      %v432 = vpop.f32.mrb[0].mxu0
      %v433 = vadd.f32 0.0, %v432
      %v434 = vpop.f32.mrb[0].mxu0
      %435 = vmatprep.mubr.bf16.mxu0 0
      %436 = vmatmul.mubr.bf16.gmra.mrb[0].mxu0 %v347
      %v437 = vpop.f32.mrb[0].mxu0
      %v438 = vadd.f32 0.0, %v437
      %v439 = vpop.f32.mrb[0].mxu0
      %v440 = vpop.f32.mrb[0].mxu0
      %v441 = vadd.f32 0.0, %v440
      %v442 = vpop.f32.mrb[0].mxu0
      %443 = vmatprep.mubr.bf16.mxu0 0
      %444 = vmatmul.mubr.bf16.gmra.mrb[0].mxu0 %v350
      %v445 = vpop.f32.mrb[0].mxu0
      %v446 = vadd.f32 0.0, %v445
      %v447 = vpop.f32.mrb[0].mxu0
      %v448 = vpop.f32.mrb[0].mxu0
      %v449 = vadd.f32 0.0, %v448
      %v450 = vpop.f32.mrb[0].mxu0
      %451 = vmatprep.mubr.bf16.mxu0 0
      %452 = vmatmul.mubr.bf16.gmra.mrb[0].mxu0 %v353
      %v453 = vpop.f32.mrb[0].mxu0
      %v454 = vadd.f32 0.0, %v453
      %v455 = vpop.f32.mrb[0].mxu0
      %v456 = vpop.f32.mrb[0].mxu0
      %v457 = vadd.f32 0.0, %v456
      %v458 = vpop.f32.mrb[0].mxu0
      %459 = vmatprep.mubr.bf16.mxu0 0
      %460 = vmatmul.mubr.bf16.gmra.mrb[0].mxu0 %v356
      %v461 = vpop.f32.mrb[0].mxu0
      %v462 = vadd.f32 0.0, %v461
      %v463 = vpop.f32.mrb[0].mxu0
      %v464 = vpop.f32.mrb[0].mxu0
      %v465 = vadd.f32 0.0, %v464
      %v466 = vpop.f32.mrb[0].mxu0
      %467 = vmatprep.mubr.bf16.mxu0 0
      %468 = vmatmul.mubr.bf16.gmra.mrb[0].mxu0 %v359
      %v469 = vpop.f32.mrb[0].mxu0
      %v470 = vadd.f32 0.0, %v469
      %v471 = vpop.f32.mrb[0].mxu0
      %v472 = vpop.f32.mrb[0].mxu0
      %v473 = vadd.f32 0.0, %v472
      %v474 = vpop.f32.mrb[0].mxu0
      %475 = vmatprep.mubr.bf16.mxu0 0
      %476 = vmatmul.mubr.bf16.gmra.mrb[0].mxu0 %v362
      %v477 = vpop.f32.mrb[0].mxu0
      %v478 = vadd.f32 0.0, %v477
      %v479 = vpop.f32.mrb[0].mxu0
      %v480 = vpop.f32.mrb[0].mxu0
      %v481 = vadd.f32 0.0, %v480
      %v482 = vpop.f32.mrb[0].mxu0
      %483 = vmatprep.mubr.bf16.mxu0 0
      %484 = vmatmul.mubr.bf16.gmra.mrb[0].mxu0 %v365
      %v485 = vpop.f32.mrb[0].mxu0
      %v486 = vadd.f32 0.0, %v485
      %v487 = vpop.f32.mrb[0].mxu0
      %v488 = vpop.f32.mrb[0].mxu0
      %v489 = vadd.f32 0.0, %v488
      %v490 = vpop.f32.mrb[0].mxu0
      %491 = vmatprep.mubr.bf16.mxu0 0
      %492 = vmatmul.mubr.bf16.gmra.mrb[0].mxu0 %v368
      %v493 = vpop.f32.mrb[0].mxu0
      %v494 = vadd.f32 0.0, %v493
      %v495 = vpop.f32.mrb[0].mxu0
      %v496 = vpop.f32.mrb[0].mxu0
      %v497 = vadd.f32 0.0, %v496
      %v498 = vpop.f32.mrb[0].mxu0
      %499 = vmatprep.mubr.bf16.mxu0 0
      %500 = vmatmul.mubr.bf16.gmra.mrb[0].mxu0 %v371
      %v501 = vpop.f32.mrb[0].mxu0
      %v502 = vadd.f32 0.0, %v501
      %v503 = vpop.f32.mrb[0].mxu0
      %v504 = vpop.f32.mrb[0].mxu0
      %v505 = vadd.f32 0.0, %v504
      %v506 = vpop.f32.mrb[0].mxu0
      %507 = vmatprep.mubr.bf16.mxu0 0
      %508 = vmatmul.mubr.bf16.gmra.mrb[0].mxu0 %v374
      %v509 = vpop.f32.mrb[0].mxu0
      %v510 = vadd.f32 0.0, %v509
      %v511 = vpop.f32.mrb[0].mxu0
      %v512 = vpop.f32.mrb[0].mxu0
      %v513 = vadd.f32 0.0, %v512
      %v514 = vpop.f32.mrb[0].mxu0
      %515 = vmatprep.mubr.bf16.mxu0 0
      %516 = vmatmul.mubr.bf16.gmra.mrb[0].mxu0 %v377
      %v517 = vpop.f32.mrb[0].mxu0
      %v518 = vadd.f32 0.0, %v517
      %v519 = vpop.f32.mrb[0].mxu0
      %v520 = vpop.f32.mrb[0].mxu0
      %v521 = vadd.f32 0.0, %v520
      %v522 = vpop.f32.mrb[0].mxu0
      %523 = vmatprep.mubr.bf16.mxu0 0
      %524 = vmatmul.mubr.bf16.gmra.mrb[0].mxu0 %v380
      %v525 = vpop.f32.mrb[0].mxu0
      %v526 = vadd.f32 0.0, %v525
      %v527 = vpop.f32.mrb[0].mxu0
      %v528 = vpop.f32.mrb[0].mxu0
      %v529 = vadd.f32 0.0, %v528
      %v530 = vpop.f32.mrb[0].mxu0
      %531 = vmatprep.mubr.bf16.mxu0 0
      %532 = vmatmul.mubr.bf16.gmra.mrb[0].mxu0 %v383
      %v533 = vpop.f32.mrb[0].mxu0
      %v534 = vadd.f32 0.0, %v533
      %v535 = vpop.f32.mrb[0].mxu0
      %v536 = vpop.f32.mrb[0].mxu0
      %v537 = vadd.f32 0.0, %v536
      %v538 = vpop.f32.mrb[0].mxu0
      %539 = vmatprep.mubr.bf16.mxu0 0
      %540 = vmatmul.mubr.bf16.gmra.mrb[0].mxu0 %v386
      %v541 = vpop.f32.mrb[0].mxu0
      %v542 = vadd.f32 0.0, %v541
      %v543 = vpop.f32.mrb[0].mxu0
      %v544 = vpop.f32.mrb[0].mxu0
      %v545 = vadd.f32 0.0, %v544
      %v546 = vpop.f32.mrb[0].mxu0
      %547 = vmatprep.mubr.bf16.mxu0 0
      %548 = vmatmul.mubr.bf16.gmra.mrb[0].mxu0 %v389
      %v549 = vpop.f32.mrb[0].mxu0
      %v550 = vadd.f32 0.0, %v549
      %v551 = vpop.f32.mrb[0].mxu0
      %v552 = vpop.f32.mrb[0].mxu0
      %v553 = vadd.f32 0.0, %v552
      %v554 = vpop.f32.mrb[0].mxu0
      %555 = vdwg.mxu0
      %v556 = vld [vmem:[%s2] sm:$0x1]
      %v558 = vlaneseq
      %v559 = vshrl.u32 %v558, 7
      %v560 = vsub.s32 0, %v559
      %v561 = vrot.slane %v556, %v560
      %v563 = vmul.f32 %v430, %v561
      %v564 = vmul.f32 %v433, %v561
      %v565 = vmul.f32 %v438, %v561
      %v566 = vmul.f32 %v441, %v561
      %v567 = vmul.f32 %v446, %v561
      %v568 = vmul.f32 %v449, %v561
      %v569 = vmul.f32 %v454, %v561
      %v570 = vmul.f32 %v457, %v561
      %v571 = vmul.f32 %v462, %v561
      %v572 = vmul.f32 %v465, %v561
      %v573 = vmul.f32 %v470, %v561
      %v574 = vmul.f32 %v473, %v561
      %v575 = vmul.f32 %v478, %v561
      %v576 = vmul.f32 %v481, %v561
      %v577 = vmul.f32 %v486, %v561
      %v578 = vmul.f32 %v489, %v561
      %v579 = vmul.f32 %v494, %v561
      %v580 = vmul.f32 %v497, %v561
      %v581 = vmul.f32 %v502, %v561
      %v582 = vmul.f32 %v505, %v561
      %v583 = vmul.f32 %v510, %v561
      %v584 = vmul.f32 %v513, %v561
      %v585 = vmul.f32 %v518, %v561
      %v586 = vmul.f32 %v521, %v561
      %v587 = vmul.f32 %v526, %v561
      %v588 = vmul.f32 %v529, %v561
      %v589 = vmul.f32 %v534, %v561
      %v590 = vmul.f32 %v537, %v561
      %v591 = vmul.f32 %v542, %v561
      %v592 = vmul.f32 %v545, %v561
      %v593 = vmul.f32 %v550, %v561
      %v594 = vmul.f32 %v553, %v561
      %v595 = vld [vmem:[%s3] sm:$0x1]
      %v597 = vlaneseq
      %v598 = vshrl.u32 %v597, 7
      %v599 = vsub.s32 0, %v598
      %v600 = vrot.slane %v595, %v599
      %v602 = vadd.f32 %v563, %v600
      %v603 = vadd.f32 %v564, %v600
      %v604 = vadd.f32 %v565, %v600
      %v605 = vadd.f32 %v566, %v600
      %v606 = vadd.f32 %v567, %v600
      %v607 = vadd.f32 %v568, %v600
      %v608 = vadd.f32 %v569, %v600
      %v609 = vadd.f32 %v570, %v600
      %v610 = vadd.f32 %v571, %v600
      %v611 = vadd.f32 %v572, %v600
      %v612 = vadd.f32 %v573, %v600
      %v613 = vadd.f32 %v574, %v600
      %v614 = vadd.f32 %v575, %v600
      %v615 = vadd.f32 %v576, %v600
      %v616 = vadd.f32 %v577, %v600
      %v617 = vadd.f32 %v578, %v600
      %v618 = vadd.f32 %v579, %v600
      %v619 = vadd.f32 %v580, %v600
      %v620 = vadd.f32 %v581, %v600
      %v621 = vadd.f32 %v582, %v600
      %v622 = vadd.f32 %v583, %v600
      %v623 = vadd.f32 %v584, %v600
      %v624 = vadd.f32 %v585, %v600
      %v625 = vadd.f32 %v586, %v600
      %v626 = vadd.f32 %v587, %v600
      %v627 = vadd.f32 %v588, %v600
      %v628 = vadd.f32 %v589, %v600
      %v629 = vadd.f32 %v590, %v600
      %v630 = vadd.f32 %v591, %v600
      %v631 = vadd.f32 %v592, %v600
      %v632 = vadd.f32 %v593, %v600
      %v633 = vadd.f32 %v594, %v600
      %v634 = vmin.f32 %v602, 20.0
      %v635 = vmin.f32 %v603, 20.0
      %v636 = vmin.f32 %v604, 20.0
      %v637 = vmin.f32 %v605, 20.0
      %v638 = vmin.f32 %v606, 20.0
      %v639 = vmin.f32 %v607, 20.0
      %v640 = vmin.f32 %v608, 20.0
      %v641 = vmin.f32 %v609, 20.0
      %v642 = vmin.f32 %v610, 20.0
      %v643 = vmin.f32 %v611, 20.0
      %v644 = vmin.f32 %v612, 20.0
      %v645 = vmin.f32 %v613, 20.0
      %v646 = vmin.f32 %v614, 20.0
      %v647 = vmin.f32 %v615, 20.0
      %v648 = vmin.f32 %v616, 20.0
      %v649 = vmin.f32 %v617, 20.0
      %v650 = vmin.f32 %v618, 20.0
      %v651 = vmin.f32 %v619, 20.0
      %v652 = vmin.f32 %v620, 20.0
      %v653 = vmin.f32 %v621, 20.0
      %v654 = vmin.f32 %v622, 20.0
      %v655 = vmin.f32 %v623, 20.0
      %v656 = vmin.f32 %v624, 20.0
      %v657 = vmin.f32 %v625, 20.0
      %v658 = vmin.f32 %v626, 20.0
      %v659 = vmin.f32 %v627, 20.0
      %v660 = vmin.f32 %v628, 20.0
      %v661 = vmin.f32 %v629, 20.0
      %v662 = vmin.f32 %v630, 20.0
      %v663 = vmin.f32 %v631, 20.0
      %v664 = vmin.f32 %v632, 20.0
      %v665 = vmin.f32 %v633, 20.0
      %v666 = vmul.f32 %v634, 1.442695
      %v667 = vpow.pop %v666
      %v668 = vmul.f32 %v635, 1.442695
      %v669 = vpow.pop %v668
      %v670 = vmul.f32 %v636, 1.442695
      %v671 = vpow.pop %v670
      %v672 = vmul.f32 %v637, 1.442695
      %v673 = vpow.pop %v672
      %v674 = vmul.f32 %v638, 1.442695
      %v675 = vpow.pop %v674
      %v676 = vmul.f32 %v639, 1.442695
      %v677 = vpow.pop %v676
      %v678 = vmul.f32 %v640, 1.442695
      %v679 = vpow.pop %v678
      %v680 = vmul.f32 %v641, 1.442695
      %v681 = vpow.pop %v680
      %v682 = vmul.f32 %v642, 1.442695
      %v683 = vpow.pop %v682
      %v684 = vmul.f32 %v643, 1.442695
      %v685 = vpow.pop %v684
      %v686 = vmul.f32 %v644, 1.442695
      %v687 = vpow.pop %v686
      %v688 = vmul.f32 %v645, 1.442695
      %v689 = vpow.pop %v688
      %v690 = vmul.f32 %v646, 1.442695
      %v691 = vpow.pop %v690
      %v692 = vmul.f32 %v647, 1.442695
      %v693 = vpow.pop %v692
      %v694 = vmul.f32 %v648, 1.442695
      %v695 = vpow.pop %v694
      %v696 = vmul.f32 %v649, 1.442695
      %v697 = vpow.pop %v696
      %v698 = vmul.f32 %v650, 1.442695
      %v699 = vpow.pop %v698
      %v700 = vmul.f32 %v651, 1.442695
      %v701 = vpow.pop %v700
      %v702 = vmul.f32 %v652, 1.442695
      %v703 = vpow.pop %v702
      %v704 = vmul.f32 %v653, 1.442695
      %v705 = vpow.pop %v704
      %v706 = vmul.f32 %v654, 1.442695
      %v707 = vpow.pop %v706
      %v708 = vmul.f32 %v655, 1.442695
      %v709 = vpow.pop %v708
      %v710 = vmul.f32 %v656, 1.442695
      %v711 = vpow.pop %v710
      %v712 = vmul.f32 %v657, 1.442695
      %v713 = vpow.pop %v712
      %v714 = vmul.f32 %v658, 1.442695
      %v715 = vpow.pop %v714
      %v716 = vmul.f32 %v659, 1.442695
      %v717 = vpow.pop %v716
      %v718 = vmul.f32 %v660, 1.442695
      %v719 = vpow.pop %v718
      %v720 = vmul.f32 %v661, 1.442695
      %v721 = vpow.pop %v720
      %v722 = vmul.f32 %v662, 1.442695
      %v723 = vpow.pop %v722
      %v724 = vmul.f32 %v663, 1.442695
      %v725 = vpow.pop %v724
      %v726 = vmul.f32 %v664, 1.442695
      %v727 = vpow.pop %v726
      %v728 = vmul.f32 %v665, 1.442695
      %v729 = vpow.pop %v728
      %v730 = vadd.f32 %v667, 2.0
      %v731 = vadd.f32 %v669, 2.0
      %v732 = vadd.f32 %v671, 2.0
      %v733 = vadd.f32 %v673, 2.0
      %v734 = vadd.f32 %v675, 2.0
      %v735 = vadd.f32 %v677, 2.0
      %v736 = vadd.f32 %v679, 2.0
      %v737 = vadd.f32 %v681, 2.0
      %v738 = vadd.f32 %v683, 2.0
      %v739 = vadd.f32 %v685, 2.0
      %v740 = vadd.f32 %v687, 2.0
      %v741 = vadd.f32 %v689, 2.0
      %v742 = vadd.f32 %v691, 2.0
      %v743 = vadd.f32 %v693, 2.0
      %v744 = vadd.f32 %v695, 2.0
      %v745 = vadd.f32 %v697, 2.0
      %v746 = vadd.f32 %v699, 2.0
      %v747 = vadd.f32 %v701, 2.0
      %v748 = vadd.f32 %v703, 2.0
      %v749 = vadd.f32 %v705, 2.0
      %v750 = vadd.f32 %v707, 2.0
      %v751 = vadd.f32 %v709, 2.0
      %v752 = vadd.f32 %v711, 2.0
      %v753 = vadd.f32 %v713, 2.0
      %v754 = vadd.f32 %v715, 2.0
      %v755 = vadd.f32 %v717, 2.0
      %v756 = vadd.f32 %v719, 2.0
      %v757 = vadd.f32 %v721, 2.0
      %v758 = vadd.f32 %v723, 2.0
      %v759 = vadd.f32 %v725, 2.0
      %v760 = vadd.f32 %v727, 2.0
      %v761 = vadd.f32 %v729, 2.0
      %v762 = vmul.f32 %v667, %v730
      %v763 = vmul.f32 %v669, %v731
      %v764 = vmul.f32 %v671, %v732
      %v765 = vmul.f32 %v673, %v733
      %v766 = vmul.f32 %v675, %v734
      %v767 = vmul.f32 %v677, %v735
      %v768 = vmul.f32 %v679, %v736
      %v769 = vmul.f32 %v681, %v737
      %v770 = vmul.f32 %v683, %v738
      %v771 = vmul.f32 %v685, %v739
      %v772 = vmul.f32 %v687, %v740
      %v773 = vmul.f32 %v689, %v741
      %v774 = vmul.f32 %v691, %v742
      %v775 = vmul.f32 %v693, %v743
      %v776 = vmul.f32 %v695, %v744
      %v777 = vmul.f32 %v697, %v745
      %v778 = vmul.f32 %v699, %v746
      %v779 = vmul.f32 %v701, %v747
      %v780 = vmul.f32 %v703, %v748
      %v781 = vmul.f32 %v705, %v749
      %v782 = vmul.f32 %v707, %v750
      %v783 = vmul.f32 %v709, %v751
      %v784 = vmul.f32 %v711, %v752
      %v785 = vmul.f32 %v713, %v753
      %v786 = vmul.f32 %v715, %v754
      %v787 = vmul.f32 %v717, %v755
      %v788 = vmul.f32 %v719, %v756
      %v789 = vmul.f32 %v721, %v757
      %v790 = vmul.f32 %v723, %v758
      %v791 = vmul.f32 %v725, %v759
      %v792 = vmul.f32 %v727, %v760
      %v793 = vmul.f32 %v729, %v761
      %v794 = vmul.f32 %v602, %v762
      %v795 = vmul.f32 %v603, %v763
      %v796 = vmul.f32 %v604, %v764
      %v797 = vmul.f32 %v605, %v765
      %v798 = vmul.f32 %v606, %v766
      %v799 = vmul.f32 %v607, %v767
      %v800 = vmul.f32 %v608, %v768
      %v801 = vmul.f32 %v609, %v769
      %v802 = vmul.f32 %v610, %v770
      %v803 = vmul.f32 %v611, %v771
      %v804 = vmul.f32 %v612, %v772
      %v805 = vmul.f32 %v613, %v773
      %v806 = vmul.f32 %v614, %v774
      %v807 = vmul.f32 %v615, %v775
      %v808 = vmul.f32 %v616, %v776
      %v809 = vmul.f32 %v617, %v777
      %v810 = vmul.f32 %v618, %v778
      %v811 = vmul.f32 %v619, %v779
      %v812 = vmul.f32 %v620, %v780
      %v813 = vmul.f32 %v621, %v781
      %v814 = vmul.f32 %v622, %v782
      %v815 = vmul.f32 %v623, %v783
      %v816 = vmul.f32 %v624, %v784
      %v817 = vmul.f32 %v625, %v785
      %v818 = vmul.f32 %v626, %v786
      %v819 = vmul.f32 %v627, %v787
      %v820 = vmul.f32 %v628, %v788
      %v821 = vmul.f32 %v629, %v789
      %v822 = vmul.f32 %v630, %v790
      %v823 = vmul.f32 %v631, %v791
      %v824 = vmul.f32 %v632, %v792
      %v825 = vmul.f32 %v633, %v793
      %v826 = vadd.f32 %v762, 2.0
      %v827 = vadd.f32 %v763, 2.0
      %v828 = vadd.f32 %v764, 2.0
      %v829 = vadd.f32 %v765, 2.0
      %v830 = vadd.f32 %v766, 2.0
      %v831 = vadd.f32 %v767, 2.0
      %v832 = vadd.f32 %v768, 2.0
      %v833 = vadd.f32 %v769, 2.0
      %v834 = vadd.f32 %v770, 2.0
      %v835 = vadd.f32 %v771, 2.0
      %v836 = vadd.f32 %v772, 2.0
      %v837 = vadd.f32 %v773, 2.0
      %v838 = vadd.f32 %v774, 2.0
      %v839 = vadd.f32 %v775, 2.0
      %v840 = vadd.f32 %v776, 2.0
      %v841 = vadd.f32 %v777, 2.0
      %v842 = vadd.f32 %v778, 2.0
      %v843 = vadd.f32 %v779, 2.0
      %v844 = vadd.f32 %v780, 2.0
      %v845 = vadd.f32 %v781, 2.0
      %v846 = vadd.f32 %v782, 2.0
      %v847 = vadd.f32 %v783, 2.0
      %v848 = vadd.f32 %v784, 2.0
      %v849 = vadd.f32 %v785, 2.0
      %v850 = vadd.f32 %v786, 2.0
      %v851 = vadd.f32 %v787, 2.0
      %v852 = vadd.f32 %v788, 2.0
      %v853 = vadd.f32 %v789, 2.0
      %v854 = vadd.f32 %v790, 2.0
      %v855 = vadd.f32 %v791, 2.0
      %v856 = vadd.f32 %v792, 2.0
      %v857 = vadd.f32 %v793, 2.0
      %v858 = vrcp.pop %v826
      %v859 = vmul.f32 %v794, %v858
      %v860 = vrcp.pop %v827
      %v861 = vmul.f32 %v795, %v860
      %v862 = vrcp.pop %v828
      %v863 = vmul.f32 %v796, %v862
      %v864 = vrcp.pop %v829
      %v865 = vmul.f32 %v797, %v864
      %v866 = vrcp.pop %v830
      %v867 = vmul.f32 %v798, %v866
      %v868 = vrcp.pop %v831
      %v869 = vmul.f32 %v799, %v868
      %v870 = vrcp.pop %v832
      %v871 = vmul.f32 %v800, %v870
      %v872 = vrcp.pop %v833
      %v873 = vmul.f32 %v801, %v872
      %v874 = vrcp.pop %v834
      %v875 = vmul.f32 %v802, %v874
      %v876 = vrcp.pop %v835
      %v877 = vmul.f32 %v803, %v876
      %v878 = vrcp.pop %v836
      %v879 = vmul.f32 %v804, %v878
      %v880 = vrcp.pop %v837
      %v881 = vmul.f32 %v805, %v880
      %v882 = vrcp.pop %v838
      %v883 = vmul.f32 %v806, %v882
      %v884 = vrcp.pop %v839
      %v885 = vmul.f32 %v807, %v884
      %v886 = vrcp.pop %v840
      %v887 = vmul.f32 %v808, %v886
      %v888 = vrcp.pop %v841
      %v889 = vmul.f32 %v809, %v888
      %v890 = vrcp.pop %v842
      %v891 = vmul.f32 %v810, %v890
      %v892 = vrcp.pop %v843
      %v893 = vmul.f32 %v811, %v892
      %v894 = vrcp.pop %v844
      %v895 = vmul.f32 %v812, %v894
      %v896 = vrcp.pop %v845
      %v897 = vmul.f32 %v813, %v896
      %v898 = vrcp.pop %v846
      %v899 = vmul.f32 %v814, %v898
      %v900 = vrcp.pop %v847
      %v901 = vmul.f32 %v815, %v900
      %v902 = vrcp.pop %v848
      %v903 = vmul.f32 %v816, %v902
      %v904 = vrcp.pop %v849
      %v905 = vmul.f32 %v817, %v904
      %v906 = vrcp.pop %v850
      %v907 = vmul.f32 %v818, %v906
      %v908 = vrcp.pop %v851
      %v909 = vmul.f32 %v819, %v908
      %v910 = vrcp.pop %v852
      %v911 = vmul.f32 %v820, %v910
      %v912 = vrcp.pop %v853
      %v913 = vmul.f32 %v821, %v912
      %v914 = vrcp.pop %v854
      %v915 = vmul.f32 %v822, %v914
      %v916 = vrcp.pop %v855
      %v917 = vmul.f32 %v823, %v916
      %v918 = vrcp.pop %v856
      %v919 = vmul.f32 %v824, %v918
      %v920 = vrcp.pop %v857
      %v921 = vmul.f32 %v825, %v920
      %v922 = vld [vmem:[%s4] sm:$0x1]
      %v924 = vlaneseq
      %v925 = vshrl.u32 %v924, 7
      %v926 = vsub.s32 0, %v925
      %v927 = vrot.slane %v922, %v926
      %v929 = vmul.f32 %v859, %v927
      %v930 = vmul.f32 %v861, %v927
      %v931 = vmul.f32 %v863, %v927
      %v932 = vmul.f32 %v865, %v927
      %v933 = vmul.f32 %v867, %v927
      %v934 = vmul.f32 %v869, %v927
      %v935 = vmul.f32 %v871, %v927
      %v936 = vmul.f32 %v873, %v927
      %v937 = vmul.f32 %v875, %v927
      %v938 = vmul.f32 %v877, %v927
      %v939 = vmul.f32 %v879, %v927
      %v940 = vmul.f32 %v881, %v927
      %v941 = vmul.f32 %v883, %v927
      %v942 = vmul.f32 %v885, %v927
      %v943 = vmul.f32 %v887, %v927
      %v944 = vmul.f32 %v889, %v927
      %v945 = vmul.f32 %v891, %v927
      %v946 = vmul.f32 %v893, %v927
      %v947 = vmul.f32 %v895, %v927
      %v948 = vmul.f32 %v897, %v927
      %v949 = vmul.f32 %v899, %v927
      %v950 = vmul.f32 %v901, %v927
      %v951 = vmul.f32 %v903, %v927
      %v952 = vmul.f32 %v905, %v927
      %v953 = vmul.f32 %v907, %v927
      %v954 = vmul.f32 %v909, %v927
      %v955 = vmul.f32 %v911, %v927
      %v956 = vmul.f32 %v913, %v927
      %v957 = vmul.f32 %v915, %v927
      %v958 = vmul.f32 %v917, %v927
      %v959 = vmul.f32 %v919, %v927
      %v960 = vmul.f32 %v921, %v927
      %v961 = vpack.c.bf16 %v930, %v929
      %v962 = vpack.c.bf16 %v932, %v931
      %v963 = vpack.c.bf16 %v934, %v933
      %v964 = vpack.c.bf16 %v936, %v935
      %v965 = vpack.c.bf16 %v938, %v937
      %v966 = vpack.c.bf16 %v940, %v939
      %v967 = vpack.c.bf16 %v942, %v941
      %v968 = vpack.c.bf16 %v944, %v943
      %v969 = vpack.c.bf16 %v946, %v945
      %v970 = vpack.c.bf16 %v948, %v947
      %v971 = vpack.c.bf16 %v950, %v949
      %v972 = vpack.c.bf16 %v952, %v951
      %v973 = vpack.c.bf16 %v954, %v953
      %v974 = vpack.c.bf16 %v956, %v955
      %v975 = vpack.c.bf16 %v958, %v957
      %v976 = vpack.c.bf16 %v960, %v959
      %v993 = vunpack.c.l.b16 %v961
      %v994 = vunpack.c.h.b16 %v961
      %v995 = vunpack.c.l.b16 %v962
      %v996 = vunpack.c.h.b16 %v962
      %v997 = vunpack.c.l.b16 %v963
      %v998 = vunpack.c.h.b16 %v963
      %v999 = vunpack.c.l.b16 %v964
      %v1000 = vunpack.c.h.b16 %v964
      %v1001 = vunpack.c.l.b16 %v965
      %v1002 = vunpack.c.h.b16 %v965
      %v1003 = vunpack.c.l.b16 %v966
      %v1004 = vunpack.c.h.b16 %v966
      %v1005 = vunpack.c.l.b16 %v967
      %v1006 = vunpack.c.h.b16 %v967
      %v1007 = vunpack.c.l.b16 %v968
      %v1008 = vunpack.c.h.b16 %v968
      %v1009 = vunpack.c.l.b16 %v969
      %v1010 = vunpack.c.h.b16 %v969
      %v1011 = vunpack.c.l.b16 %v970
      %v1012 = vunpack.c.h.b16 %v970
      %v1013 = vunpack.c.l.b16 %v971
      %v1014 = vunpack.c.h.b16 %v971
      %v1015 = vunpack.c.l.b16 %v972
      %v1016 = vunpack.c.h.b16 %v972
      %v1017 = vunpack.c.l.b16 %v973
      %v1018 = vunpack.c.h.b16 %v973
      %v1019 = vunpack.c.l.b16 %v974
      %v1020 = vunpack.c.h.b16 %v974
      %v1021 = vunpack.c.l.b16 %v975
      %v1022 = vunpack.c.h.b16 %v975
      %v1023 = vunpack.c.l.b16 %v976
      %v1024 = vunpack.c.h.b16 %v976
      %v1025 = vpack.c.b16 %v993, %v993
      %v1026 = vpack.c.b16 %v994, %v994
      %v1027 = vpack.c.b16 %v995, %v995
      %v1028 = vpack.c.b16 %v996, %v996
      %v1029 = vpack.c.b16 %v997, %v997
      %v1030 = vpack.c.b16 %v998, %v998
      %v1031 = vpack.c.b16 %v999, %v999
      %v1032 = vpack.c.b16 %v1000, %v1000
      %v1033 = vpack.c.b16 %v1001, %v1001
      %v1034 = vpack.c.b16 %v1002, %v1002
      %v1035 = vpack.c.b16 %v1003, %v1003
      %v1036 = vpack.c.b16 %v1004, %v1004
      %v1037 = vpack.c.b16 %v1005, %v1005
      %v1038 = vpack.c.b16 %v1006, %v1006
      %v1039 = vpack.c.b16 %v1007, %v1007
      %v1040 = vpack.c.b16 %v1008, %v1008
      %v1041 = vpack.c.b16 %v1009, %v1009
      %v1042 = vpack.c.b16 %v1010, %v1010
      %v1043 = vpack.c.b16 %v1011, %v1011
      %v1044 = vpack.c.b16 %v1012, %v1012
      %v1045 = vpack.c.b16 %v1013, %v1013
      %v1046 = vpack.c.b16 %v1014, %v1014
      %v1047 = vpack.c.b16 %v1015, %v1015
      %v1048 = vpack.c.b16 %v1016, %v1016
      %v1049 = vpack.c.b16 %v1017, %v1017
      %v1050 = vpack.c.b16 %v1018, %v1018
      %v1051 = vpack.c.b16 %v1019, %v1019
      %v1052 = vpack.c.b16 %v1020, %v1020
      %v1053 = vpack.c.b16 %v1021, %v1021
      %v1054 = vpack.c.b16 %v1022, %v1022
      %v1055 = vpack.c.b16 %v1023, %v1023
      %v1056 = vpack.c.b16 %v1024, %v1024
      %vm1089 = vcmask 60416
      %1090 = vst.msk [vmem:[%s226] sm:$0xf] %vm1089, %v1025
      %1091 = vst.msk [vmem:[%s226 + $0x4] sm:$0xf] %vm1089, %v1026
      %1092 = vst.msk [vmem:[%s226 + $0x8] sm:$0xf] %vm1089, %v1027
      %1093 = vst.msk [vmem:[%s226 + $0xc] sm:$0xf] %vm1089, %v1028
      %1094 = vst.msk [vmem:[%s226 + $0x10] sm:$0xf] %vm1089, %v1029
      %1095 = vst.msk [vmem:[%s226 + $0x14] sm:$0xf] %vm1089, %v1030
      %1096 = vst.msk [vmem:[%s226 + $0x18] sm:$0xf] %vm1089, %v1031
      %1097 = vst.msk [vmem:[%s226 + $0x1c] sm:$0xf] %vm1089, %v1032
      %1098 = vst.msk [vmem:[%s226 + $0x20] sm:$0xf] %vm1089, %v1033
      %1099 = vst.msk [vmem:[%s226 + $0x24] sm:$0xf] %vm1089, %v1034
      %1100 = vst.msk [vmem:[%s226 + $0x28] sm:$0xf] %vm1089, %v1035
      %1101 = vst.msk [vmem:[%s226 + $0x2c] sm:$0xf] %vm1089, %v1036
      %1102 = vst.msk [vmem:[%s226 + $0x30] sm:$0xf] %vm1089, %v1037
      %1103 = vst.msk [vmem:[%s226 + $0x34] sm:$0xf] %vm1089, %v1038
      %1104 = vst.msk [vmem:[%s226 + $0x38] sm:$0xf] %vm1089, %v1039
      %1105 = vst.msk [vmem:[%s226 + $0x3c] sm:$0xf] %vm1089, %v1040
      %1106 = vst.msk [vmem:[%s226 + $0x40] sm:$0xf] %vm1089, %v1041
      %1107 = vst.msk [vmem:[%s226 + $0x44] sm:$0xf] %vm1089, %v1042
      %1108 = vst.msk [vmem:[%s226 + $0x48] sm:$0xf] %vm1089, %v1043
      %1109 = vst.msk [vmem:[%s226 + $0x4c] sm:$0xf] %vm1089, %v1044
      %1110 = vst.msk [vmem:[%s226 + $0x50] sm:$0xf] %vm1089, %v1045
      %1111 = vst.msk [vmem:[%s226 + $0x54] sm:$0xf] %vm1089, %v1046
      %1112 = vst.msk [vmem:[%s226 + $0x58] sm:$0xf] %vm1089, %v1047
      %1113 = vst.msk [vmem:[%s226 + $0x5c] sm:$0xf] %vm1089, %v1048
      %1114 = vst.msk [vmem:[%s226 + $0x60] sm:$0xf] %vm1089, %v1049
      %1115 = vst.msk [vmem:[%s226 + $0x64] sm:$0xf] %vm1089, %v1050
      %1116 = vst.msk [vmem:[%s226 + $0x68] sm:$0xf] %vm1089, %v1051
      %1117 = vst.msk [vmem:[%s226 + $0x6c] sm:$0xf] %vm1089, %v1052
      %1118 = vst.msk [vmem:[%s226 + $0x70] sm:$0xf] %vm1089, %v1053
      %1119 = vst.msk [vmem:[%s226 + $0x74] sm:$0xf] %vm1089, %v1054
      %1120 = vst.msk [vmem:[%s226 + $0x78] sm:$0xf] %vm1089, %v1055
      %1121 = vst.msk [vmem:[%s226 + $0x7c] sm:$0xf] %vm1089, %v1056
      %s1122 = smul.u32 32, %s16
      %p1123 = scmp.lt.s32.totalorder %s1122, 63
      %s1124 = scalar_select %p1123, %s1122, 63
      %s1125 = smul.addr %s1124, 4
      %s1126 = scalar_lea.vmem %s5, %s1125
      // Predicated region
      $region41: #{tpu_custom_call.1} parent=39 // pred_check
        %p1127 = pneg %p144
      $region42: #{tpu_custom_call.1} parent=39 // pred_check_branch
        %1129 = sbr.rel (%p1127) target = $region44
      $region43: #{tpu_custom_call.1} parent=39 // pred_region
        %s1130 = smul.u32 32, %s16
      $region44: #{tpu_custom_call.1} parent=39 // pred_fallthru
        _
    $region40: #{tpu_custom_call.1} parent=5 // pred_fallthru
      _
    %p1131 = scmp.le.s32.totalorder 2, %s11
    // Predicated region
    $region45: #{tpu_custom_call.1} parent=5 // pred_check
      %p1132 = pneg %p1131
    $region46: #{tpu_custom_call.1} parent=5 // pred_check_branch
      %1134 = sbr.rel (%p1132) target = $region48
    $region47: #{tpu_custom_call.1} parent=5 // pred_region
      %s1135 = ssub.s32 %s11, 2
      // Predicated region
      $region49: #{tpu_custom_call.1} parent=47 // pred_check
        %p1136 = pneg %p150
      $region50: #{tpu_custom_call.1} parent=47 // pred_check_branch
        %1138 = sbr.rel (%p1136) target = $region52
      $region51: #{tpu_custom_call.1} parent=47 // pred_region
        %s1139 = smul.u32 32, %s17
        %p1140 = scmp.lt.s32.totalorder %s1139, 63
        %s1141 = scalar_select %p1140, %s1139, 63
        %s1142 = smul.addr %s1141, 4
        %s1143 = scalar_lea.vmem %s5, %s1142
      $region52: #{tpu_custom_call.1} parent=47 // pred_fallthru
        _
    $region48: #{tpu_custom_call.1} parent=5 // pred_fallthru
      _
  $region6: #{tpu_custom_call.1} parent=0 // loop_footer
    %s15 = sadd.s32 1, %s11
  $region7: #{tpu_custom_call.1} parent=0 // loop_footer_branch
    %10 = sbr.rel target = $region3
  $region8: #{tpu_custom_call.1} parent=0 // loop_exit
    _

</llo_original>
